<compile_context>
chip_gen: v6e
topology: v6e:2x2x1
jax: 0.10.0
libtpu: 0.0.40
codegen_flags: <defaults>
</compile_context>

<pallas_src>
import math

import jax
import jax.numpy as jnp
from jax import lax
from jax.experimental import pallas as pl
from jax.experimental.pallas import tpu as pltpu


_LANE = 128


def _round_up(x, m):
    return ((x + m - 1) // m) * m


# -----------------------------------------------------------------------------
# Pallas kernels: two small MXU matmuls + weighted Frobenius partial sums / tile
# -----------------------------------------------------------------------------
def _make_response_kernel(rhs_row_major: bool):
    """rhs_row_major=True  -> RHS blocks are (tn, 2W): contract last dims (A @ B^T).
       rhs_row_major=False -> RHS blocks are (2W, tn): plain A @ B."""

    def kernel(lhs_w_ref, lhs_ref, t_ref, f_ref, out_ref):
        if rhs_row_major:
            dn = (((1,), (1,)), ((), ()))
            rt = lax.dot_general(lhs_w_ref[...], t_ref[...], dn,
                                 preferred_element_type=jnp.float32)
            rf = lax.dot_general(lhs_ref[...], f_ref[...], dn,
                                 preferred_element_type=jnp.float32)
        else:
            rt = jnp.dot(lhs_w_ref[...], t_ref[...],
                         preferred_element_type=jnp.float32)
            rf = jnp.dot(lhs_ref[...], f_ref[...],
                         preferred_element_type=jnp.float32)
        d = rf - rt
        out_ref[0, 0] = jnp.sum(d * d)     # partial ||RF - RT||_F^2
        out_ref[0, 1] = jnp.sum(rt * rt)   # partial ||RT||_F^2

    return kernel


def _choose_row_tile(h, two_w, elem_bytes, bytes_budget):
    """Rows of the (H, 2W) operand handled per grid step.

    Multiple of 128 (lane-dense result / aligned tiles).  Does NOT shrink to a
    divisor of H — the caller pads H up to num_tiles * tn with zeros instead.
    Forces >= 2 tiles whenever there is enough work so the 'parallel' grid axis
    can shard across both TensorCores on v7x.
    """
    cap = max(_LANE, (bytes_budget // (two_w * elem_bytes)) // _LANE * _LANE)
    h_g = _round_up(h, _LANE)
    tn = min(h_g, cap)
    if h_g >= 2 * _LANE:
        tn = min(tn, _round_up((h_g + 1) // 2, _LANE))
    num_tiles = -(-h // tn)   # cdiv
    return tn, num_tiles


def _response_matching_loss_pallas(lhs_w, lhs, t_pack, f_pack, tn, num_tiles,
                                   rhs_row_major):
    m4, two_w = lhs.shape
    if rhs_row_major:
        rhs_block = (tn, two_w)
        rhs_map = lambda j: (j, 0)
    else:
        rhs_block = (two_w, tn)
        rhs_map = lambda j: (0, j)

    partials = pl.pallas_call(
        _make_response_kernel(rhs_row_major),
        out_shape=jax.ShapeDtypeStruct((num_tiles, 2), jnp.float32),
        grid=(num_tiles,),
        in_specs=[
            pl.BlockSpec((m4, two_w), lambda j: (0, 0)),   # weighted probe (broadcast)
            pl.BlockSpec((m4, two_w), lambda j: (0, 0)),   # unweighted probe (broadcast)
            pl.BlockSpec(rhs_block, rhs_map),              # target tile
            pl.BlockSpec(rhs_block, rhs_map),              # transfer-matrix tile
        ],
        out_specs=pl.BlockSpec((1, 2), lambda j: (j, 0),
                               memory_space=pltpu.MemorySpace.SMEM),
        compiler_params=pltpu.CompilerParams(
            dimension_semantics=("parallel",),
            vmem_limit_bytes=48 << 20),
    )(lhs_w, lhs, t_pack, f_pack)

    num = jnp.sum(partials[:, 0])
    den = jnp.sum(partials[:, 1])
    # Like the PyTorch reference, a zero target response yields inf/nan —
    # no epsilon added, to preserve semantics.
    return jnp.sqrt(num) * lax.rsqrt(den)


# -----------------------------------------------------------------------------
# Probe construction (closed form of ifft(one-hot rows)), packed for the kernel
# -----------------------------------------------------------------------------
def _fourier_probe_lhs(W, num_modes, weight=None):
    """Packed probe LHS [[P_r, -P_i], [P_i, P_r]] (4m, 2W), optionally row-weighted.

    torch.fft.ifft(e_k)[n] = (1/W) * exp(+2*pi*i*k*n/W).
    """
    ks = jnp.concatenate(
        [jnp.arange(num_modes), jnp.arange(W - num_modes, W)]).astype(jnp.float32)
    n = jnp.arange(W, dtype=jnp.float32)
    ang = (2.0 * math.pi / W) * ks[:, None] * n[None, :]
    pr = jnp.cos(ang) / W
    pi_ = jnp.sin(ang) / W
    if weight is not None:
        w = weight.astype(jnp.float32)[:, None]
        pr = pr * w
        pi_ = pi_ * w
    top = jnp.concatenate([pr, -pi_], axis=1)
    bot = jnp.concatenate([pi_, pr], axis=1)
    return jnp.concatenate([top, bot], axis=0)           # f32 (4m, 2W)


class ResponseMatchingLoss:
    """JAX/Pallas port of the PyTorch ResponseMatchingLoss ('fourier' mode)."""

    def __init__(self, probe_source_mode, num_modes, num_random_sources=1,
                 freq_len=16, compute_dtype=jnp.bfloat16, tile_bytes=8 << 20):
        assert probe_source_mode in ("random", "fourier"), (
            f"probe_source_mode should be one of ['random', 'fourier'], "
            f"got {probe_source_mode}")
        if probe_source_mode == "random":
            # matches PyTorch: random probe source is deprecated
            raise NotImplementedError(
                "random probe source is deprecated, please use fourier probe source")
        self.probe_source_mode = probe_source_mode
        self.num_modes = num_modes
        self.num_random_sources = num_random_sources
        self.compute_dtype = compute_dtype     # streamed-operand / probe dtype
        self.tile_bytes = int(tile_bytes)      # per-RHS-block VMEM budget
        # TODO(synk): reference loads ./core/fft_weights.h5; deterministic stand-in here.
        base = jnp.arange(freq_len, dtype=jnp.float32)
        self.x1_freq_weight = jnp.sqrt(1.0 + 0.10 * base)
        self.x2_freq_weight = jnp.sqrt(2.0 + 0.05 * base)
        self._lhs_cache = {}   # (W, layer_number) -> packed (pre-weighted) probe LHS

    def _row_weight(self, layer_number):
        m = self.num_modes
        if layer_number == 0:
            return None
        if layer_number == 1:
            return jnp.concatenate([self.x1_freq_weight[:m], self.x1_freq_weight[-m:]])
        if layer_number == 2:
            return jnp.concatenate([self.x2_freq_weight[:m], self.x2_freq_weight[-m:]])
        raise ValueError(
            f"layer_number should be one of [0, 1, 2], but got {layer_number}")

    def _probe_lhs(self, W, layer_number):
        key = (W, layer_number)
        lhs = self._lhs_cache.get(key)
        if lhs is None:
            lhs = _fourier_probe_lhs(W, self.num_modes,
                                     self._row_weight(layer_number))
            lhs = lhs.astype(self.compute_dtype)
            self._lhs_cache[key] = lhs
        return lhs

    def __call__(self, target, transfer_matrix, layer_number=0):
        H, W = transfer_matrix.shape[-2], transfer_matrix.shape[-1]
        W_tg = target.shape[-1]

        t_r = jnp.real(target).astype(jnp.float32)
        t_i = jnp.imag(target).astype(jnp.float32)
        if target.shape != transfer_matrix.shape:
            # TODO(synk): verify jax.image.resize(bilinear, antialias=False) matches
            # torch.nn.functional.interpolate(align_corners=False) on the resize path.
            t_r = jax.image.resize(t_r, (H, W), method="bilinear", antialias=False)
            t_i = jax.image.resize(t_i, (H, W), method="bilinear", antialias=False)
            ds_rate = W / W_tg
            t_r = t_r / ds_rate
            t_i = t_i / ds_rate

        f_r = jnp.real(transfer_matrix).astype(jnp.float32)
        f_i = jnp.imag(transfer_matrix).astype(jnp.float32)

        dt = self.compute_dtype
        lhs_w = self._probe_lhs(W, layer_number)   # weighted probe   (4m, 2W), cached
        lhs = self._probe_lhs(W, 0)                # unweighted probe (4m, 2W), cached

        elem_bytes = jnp.dtype(dt).itemsize
        tn, num_tiles = _choose_row_tile(H, 2 * W, elem_bytes, self.tile_bytes)
        h_padded = num_tiles * tn

        # Lane-dense (tn, 2W) row-major blocks need 2W >= 128; otherwise fall back
        # to the transposed (2W, tn) layout so the tiles stay lane-dense.
        rhs_row_major = (2 * W >= _LANE)
        if rhs_row_major:
            # (H_pad, 2W) = [X_r | X_i] on the last axis -- no wrapper transpose.
            t_pack = jnp.concatenate([t_r, t_i], axis=-1).astype(dt)
            f_pack = jnp.concatenate([f_r, f_i], axis=-1).astype(dt)
            if h_padded != H:
                pad = ((0, h_padded - H), (0, 0))   # zero rows contribute 0
                t_pack = jnp.pad(t_pack, pad)
                f_pack = jnp.pad(f_pack, pad)
        else:
            t_pack = jnp.concatenate([t_r.T, t_i.T], axis=0).astype(dt)
            f_pack = jnp.concatenate([f_r.T, f_i.T], axis=0).astype(dt)
            if h_padded != H:
                pad = ((0, 0), (0, h_padded - H))   # zero cols contribute 0
                t_pack = jnp.pad(t_pack, pad)
                f_pack = jnp.pad(f_pack, pad)

        return _response_matching_loss_pallas(
            lhs_w, lhs, t_pack, f_pack, tn, num_tiles, rhs_row_major)


# -----------------------------------------------------------------------------
def _reference_loss(mod, target, transfer_matrix, layer_number):
    """Pure-JAX complex reference (same math as the PyTorch module)."""
    W = transfer_matrix.shape[-1]
    m = mod.num_modes
    ks = jnp.concatenate([jnp.arange(m), jnp.arange(W - m, W)])
    basis = jnp.zeros((2 * m, W), jnp.complex64).at[jnp.arange(2 * m), ks].set(1.0)
    w = mod._row_weight(layer_number)
    basis_t = basis if w is None else basis * w[:, None].astype(jnp.complex64)
    probe_t = jnp.fft.ifft(basis_t, axis=-1)
    probe_f = jnp.fft.ifft(basis, axis=-1)
    rt = probe_t @ target.T
    rf = probe_f @ transfer_matrix.T
    return jnp.linalg.norm(rf - rt) / jnp.linalg.norm(rt)


if __name__ == "__main__":
    key = jax.random.PRNGKey(0)

    def make_pair(key, H, W):
        k1, k2, k3, k4 = jax.random.split(key, 4)
        tgt = (jax.random.normal(k1, (H, W), jnp.float32)
               + 1j * jax.random.normal(k2, (H, W), jnp.float32)).astype(jnp.complex64)
        xfer = (jax.random.normal(k3, (H, W), jnp.float32)
                + 1j * jax.random.normal(k4, (H, W), jnp.float32)).astype(jnp.complex64)
        return tgt, xfer

    ok = True

    # --- Case 1: small W (transposed lane-dense layout path), layer 1 ----------
    H1, W1, m1 = 16, 16, 4
    kA, kB = jax.random.split(key)
    tgt1, xfer1 = make_pair(kA, H1, W1)

    mod1_f32 = ResponseMatchingLoss("fourier", num_modes=m1, freq_len=W1,
                                    compute_dtype=jnp.float32)
    loss1_f32 = mod1_f32(tgt1, xfer1, layer_number=1)
    mod1_bf16 = ResponseMatchingLoss("fourier", num_modes=m1, freq_len=W1)
    loss1_bf16 = mod1_bf16(tgt1, xfer1, layer_number=1)
    ref1 = _reference_loss(mod1_f32, tgt1, xfer1, layer_number=1)
    jax.block_until_ready((loss1_f32, loss1_bf16, ref1))
    ok &= bool(jnp.isfinite(loss1_f32)) and loss1_f32.shape == ()
    ok &= bool(jnp.allclose(loss1_f32, ref1, rtol=1e-3, atol=1e-5))
    ok &= bool(jnp.allclose(loss1_bf16, ref1, rtol=3e-2, atol=1e-4))

    # --- Case 2: W >= 64 (row-major no-transpose path, padded H, 2 tiles), layer 2
    H2, W2, m2 = 300, 128, 8
    tgt2, xfer2 = make_pair(kB, H2, W2)

    mod2_f32 = ResponseMatchingLoss("fourier", num_modes=m2, freq_len=W2,
                                    compute_dtype=jnp.float32)
    loss2_f32 = mod2_f32(tgt2, xfer2, layer_number=2)
    mod2_bf16 = ResponseMatchingLoss("fourier", num_modes=m2, freq_len=W2)
    loss2_bf16 = mod2_bf16(tgt2, xfer2, layer_number=2)
    ref2 = _reference_loss(mod2_f32, tgt2, xfer2, layer_number=2)
    jax.block_until_ready((loss2_f32, loss2_bf16, ref2))
    ok &= bool(jnp.isfinite(loss2_f32)) and loss2_f32.shape == ()
    ok &= bool(jnp.allclose(loss2_f32, ref2, rtol=1e-3, atol=1e-5))
    ok &= bool(jnp.allclose(loss2_bf16, ref2, rtol=3e-2, atol=1e-4))

    assert ok, {
        "case1": (float(loss1_f32), float(loss1_bf16), float(ref1)),
        "case2": (float(loss2_f32), float(loss2_bf16), float(ref2)),
    }
    print("KERNEL_OK")
</pallas_src>

<mosaic_0001>
module attributes {stable_mosaic.version = 11 : i64} {
  func.func @kernel(%arg0: i32, %arg1: memref<16x32xf32, #tpu.memory_space<vmem>>, %arg2: memref<16x32xf32, #tpu.memory_space<vmem>>, %arg3: memref<32x128xf32, #tpu.memory_space<vmem>>, %arg4: memref<32x128xf32, #tpu.memory_space<vmem>>, %arg5: memref<1x2xf32, #tpu.memory_space<smem>>) attributes {dimension_semantics = [#tpu.dimension_semantics<parallel>], iteration_bounds = array<i64: 1>, scalar_prefetch = 0 : i64, scratch_operands = 0 : i64, tpu.core_type = #tpu.core_type<tc>, window_params = [{pipeline_mode = #tpu.pipeline_mode<synchronous>, transform_indices = @transform_0, window_bounds = array<i64: 16, 32>}, {pipeline_mode = #tpu.pipeline_mode<synchronous>, transform_indices = @transform_1, window_bounds = array<i64: 16, 32>}, {transform_indices = @transform_2, window_bounds = array<i64: 32, 128>}, {transform_indices = @transform_3, window_bounds = array<i64: 32, 128>}, {transform_indices = @transform_4, window_bounds = array<i64: 1, 2>}]} {
    %c0 = arith.constant 0 : index
    %c0_0 = arith.constant 0 : index
    %0 = vector.load %arg1[%c0, %c0_0] : memref<16x32xf32, #tpu.memory_space<vmem>>, vector<16x32xf32>
    %c0_1 = arith.constant 0 : index
    %c0_2 = arith.constant 0 : index
    %1 = vector.load %arg3[%c0_1, %c0_2] : memref<32x128xf32, #tpu.memory_space<vmem>>, vector<32x128xf32>
    %cst = arith.constant dense<0.000000e+00> : vector<16x128xf32>
    %2 = tpu.matmul %0, %1, %cst {dimension_numbers = #tpu.dot_dimension_numbers<[1], [0], [0], [1], [0, 0, 1, 1], [], []>} : vector<16x32xf32>, vector<32x128xf32>, vector<16x128xf32> -> vector<16x128xf32>
    %c0_3 = arith.constant 0 : index
    %c0_4 = arith.constant 0 : index
    %3 = vector.load %arg2[%c0_3, %c0_4] : memref<16x32xf32, #tpu.memory_space<vmem>>, vector<16x32xf32>
    %c0_5 = arith.constant 0 : index
    %c0_6 = arith.constant 0 : index
    %4 = vector.load %arg4[%c0_5, %c0_6] : memref<32x128xf32, #tpu.memory_space<vmem>>, vector<32x128xf32>
    %cst_7 = arith.constant dense<0.000000e+00> : vector<16x128xf32>
    %5 = tpu.matmul %3, %4, %cst_7 {dimension_numbers = #tpu.dot_dimension_numbers<[1], [0], [0], [1], [0, 0, 1, 1], [], []>} : vector<16x32xf32>, vector<32x128xf32>, vector<16x128xf32> -> vector<16x128xf32>
    %6 = arith.subf %5, %2 : vector<16x128xf32>
    %7 = arith.mulf %6, %6 : vector<16x128xf32>
    %8 = vector.shape_cast %7 : vector<16x128xf32> to vector<1x16x128xf32>
    %cst_8 = arith.constant dense<0.000000e+00> : vector<1xf32>
    %9 = vector.multi_reduction <add>, %8, %cst_8 [1, 2] : vector<1x16x128xf32> to vector<1xf32>
    %10 = vector.shape_cast %9 : vector<1xf32> to vector<1x1x1xf32>
    %11 = vector.extract %10[0, 0, 0] : f32 from vector<1x1x1xf32>
    %c0_9 = arith.constant 0 : index
    %c0_10 = arith.constant 0 : index
    %12 = memref.load %arg5[%c0_9, %c0_10] : memref<1x2xf32, #tpu.memory_space<smem>>
    memref.store %11, %arg5[%c0_9, %c0_10] : memref<1x2xf32, #tpu.memory_space<smem>>
    %13 = arith.mulf %2, %2 : vector<16x128xf32>
    %14 = vector.shape_cast %13 : vector<16x128xf32> to vector<1x16x128xf32>
    %cst_11 = arith.constant dense<0.000000e+00> : vector<1xf32>
    %15 = vector.multi_reduction <add>, %14, %cst_11 [1, 2] : vector<1x16x128xf32> to vector<1xf32>
    %16 = vector.shape_cast %15 : vector<1xf32> to vector<1x1x1xf32>
    %17 = vector.extract %16[0, 0, 0] : f32 from vector<1x1x1xf32>
    %c0_12 = arith.constant 0 : index
    %c1 = arith.constant 1 : index
    %18 = memref.load %arg5[%c0_12, %c1] : memref<1x2xf32, #tpu.memory_space<smem>>
    memref.store %17, %arg5[%c0_12, %c1] : memref<1x2xf32, #tpu.memory_space<smem>>
    return
  }
  func.func @transform_0(%arg0: i32) -> (i32, i32) {
    %c0_i32 = arith.constant 0 : i32
    %c0_i32_0 = arith.constant 0 : i32
    %c0_i32_1 = arith.constant 0 : i32
    return %c0_i32, %c0_i32_0 : i32, i32
  }
  func.func @transform_1(%arg0: i32) -> (i32, i32) {
    %c0_i32 = arith.constant 0 : i32
    %c0_i32_0 = arith.constant 0 : i32
    %c0_i32_1 = arith.constant 0 : i32
    return %c0_i32, %c0_i32_0 : i32, i32
  }
  func.func @transform_2(%arg0: i32) -> (i32, i32) {
    %c0_i32 = arith.constant 0 : i32
    %c0_i32_0 = arith.constant 0 : i32
    return %c0_i32, %arg0 : i32, i32
  }
  func.func @transform_3(%arg0: i32) -> (i32, i32) {
    %c0_i32 = arith.constant 0 : i32
    %c0_i32_0 = arith.constant 0 : i32
    return %c0_i32, %arg0 : i32, i32
  }
  func.func @transform_4(%arg0: i32) -> (i32, i32) {
    %c0_i32 = arith.constant 0 : i32
    %c0_i32_0 = arith.constant 0 : i32
    return %arg0, %c0_i32 : i32, i32
  }
}

</mosaic_0001>

<llo_original>
// kernel: tpu_custom_call.1
$region0: #{tpu_custom_call.1}
  #allocation0 [shape = 'u32[]', space=smem, size = 0x4, offset = 0x4, fixed_abs, tag = 'smem constant byte address 0x4 - core index']
  #allocation1 [shape = 'u32[144,128]{1,0:T(1,128)}', space=vmem, size = 0x12000, scoped, tag = 'internal scratch']
  %s0 = inlined_call_operand.hbm [shape: f32[16,32], index: 0, kind: input, shape index: {}]
  %s1 = inlined_call_operand.hbm [shape: f32[16,32], index: 1, kind: input, shape index: {}]
  %s2 = inlined_call_operand.hbm [shape: f32[32,128], index: 2, kind: input, shape index: {}]
  %s3 = inlined_call_operand.hbm [shape: f32[32,128], index: 3, kind: input, shape index: {}]
  %s4 = inlined_call_operand.hbm [shape: f32[1,2], index: 4, kind: output, shape index: {}]
  %s5 = sld [smem:[#allocation0]]
  $region42: #{tpu_custom_call.1} parent=0
    _
  %s7 = ssub.s32 1, %s5
  %s8 = scalar_select 0, %s7, %s5
  $region1: #{tpu_custom_call.1} parent=0
    #allocation2 [shape = 'u8[8192]{0}', space=vmem, size = 0x2000, scoped, tag = 'input window, operand 0, single buffered']
    #allocation3 [shape = 's32[1]{0}', space=sflag, size = 0x4, scoped, tag = 'scoped memory for tpu_custom_call.1']
    #allocation4 [shape = 's32[1]{0}', space=sflag, size = 0x4, scoped, tag = 'scoped memory for tpu_custom_call.1']
    #allocation5 [shape = 'u8[8192]{0}', space=vmem, size = 0x2000, scoped, tag = 'input window, operand 1, single buffered']
    #allocation6 [shape = 's32[1]{0}', space=sflag, size = 0x4, scoped, tag = 'scoped memory for tpu_custom_call.1']
    #allocation7 [shape = 'u8[16384]{0}', space=vmem, size = 0x4000, scoped, tag = 'input window, operand 2, single buffered']
    #allocation8 [shape = 'u8[16384]{0}', space=vmem, size = 0x4000, scoped, tag = 'input window, operand 3, single buffered']
    #allocation9 [shape = 's32[1]{0}', space=sflag, size = 0x4, scoped, tag = 'scoped memory for tpu_custom_call.1']
    #allocation10 [shape = 'u8[512]{0}', space=smem, size = 0x200, scoped, tag = 'output window, operand 0, single buffered']
    %9 = vsyncpa [#allocation3], 0
    %10 = vsyncpa [#allocation6], 0
    %11 = vsyncpa [#allocation9], 0
    %12 = vsyncpa [#allocation4], 0
    // Predicated region
    $region2: #{tpu_custom_call.1} parent=1 // pred_check
      _
    $region3: #{tpu_custom_call.1} parent=1 // pred_check_branch
      %14 = sbr.rel (0) target = $region5
    $region4: #{tpu_custom_call.1} parent=1 // pred_region
      %s16 = ssub.s32 256, 256
      %17 = vsyncadd [#allocation3], %s16
      %s18 = sshll.u32 [#allocation2], 4
      %s19 = int_to_ptr.vmem [resolvable:$true] %s18
      %24 = dma.hbm_to_vmem [thread:$0]  %s0, 256, %s19, [#allocation3], 128, 128, 8
    $region5: #{tpu_custom_call.1} parent=1 // pred_fallthru
      _
    // Predicated region
    $region6: #{tpu_custom_call.1} parent=1 // pred_check
      _
    $region7: #{tpu_custom_call.1} parent=1 // pred_check_branch
      %26 = sbr.rel (0) target = $region9
    $region8: #{tpu_custom_call.1} parent=1 // pred_region
      %s28 = ssub.s32 256, 256
      %29 = vsyncadd [#allocation6], %s28
      %s30 = sshll.u32 [#allocation5], 4
      %s31 = int_to_ptr.vmem [resolvable:$true] %s30
      %36 = dma.hbm_to_vmem [thread:$0]  %s1, 256, %s31, [#allocation6], 128, 128, 8
    $region9: #{tpu_custom_call.1} parent=1 // pred_fallthru
      _
    // Predicated region
    $region10: #{tpu_custom_call.1} parent=1 // pred_check
      _
    $region11: #{tpu_custom_call.1} parent=1 // pred_check_branch
      %38 = sbr.rel (0) target = $region13
    $region12: #{tpu_custom_call.1} parent=1 // pred_region
      %s40 = ssub.s32 512, 512
      %41 = vsyncadd [#allocation6], %s40
      %s42 = sshll.u32 [#allocation7], 4
      %s43 = int_to_ptr.vmem [resolvable:$true] %s42
      %48 = dma.hbm_to_vmem [thread:$0]  %s2, 512, %s43, [#allocation6], 128, 128, 8
    $region13: #{tpu_custom_call.1} parent=1 // pred_fallthru
      _
    // Predicated region
    $region14: #{tpu_custom_call.1} parent=1 // pred_check
      _
    $region15: #{tpu_custom_call.1} parent=1 // pred_check_branch
      %50 = sbr.rel (0) target = $region17
    $region16: #{tpu_custom_call.1} parent=1 // pred_region
      %s52 = ssub.s32 512, 512
      %53 = vsyncadd [#allocation9], %s52
      %s54 = sshll.u32 [#allocation8], 4
      %s55 = int_to_ptr.vmem [resolvable:$true] %s54
      %60 = dma.hbm_to_vmem [thread:$0]  %s3, 512, %s55, [#allocation9], 128, 128, 8
    $region17: #{tpu_custom_call.1} parent=1 // pred_fallthru
      _
    // Predicated region
    $region18: #{tpu_custom_call.1} parent=1 // pred_check
      _
    $region19: #{tpu_custom_call.1} parent=1 // pred_check_branch
      %62 = sbr.rel (0) target = $region21
    $region20: #{tpu_custom_call.1} parent=1 // pred_region
      %63 = dma.done [#allocation3], 256
    $region21: #{tpu_custom_call.1} parent=1 // pred_fallthru
      _
    // Predicated region
    $region22: #{tpu_custom_call.1} parent=1 // pred_check
      _
    $region23: #{tpu_custom_call.1} parent=1 // pred_check_branch
      %65 = sbr.rel (0) target = $region25
    $region24: #{tpu_custom_call.1} parent=1 // pred_region
      %66 = dma.done [#allocation6], 256
    $region25: #{tpu_custom_call.1} parent=1 // pred_fallthru
      _
    // Predicated region
    $region26: #{tpu_custom_call.1} parent=1 // pred_check
      _
    $region27: #{tpu_custom_call.1} parent=1 // pred_check_branch
      %68 = sbr.rel (0) target = $region29
    $region28: #{tpu_custom_call.1} parent=1 // pred_region
      %69 = dma.done [#allocation6], 512
    $region29: #{tpu_custom_call.1} parent=1 // pred_fallthru
      _
    // Predicated region
    $region30: #{tpu_custom_call.1} parent=1 // pred_check
      _
    $region31: #{tpu_custom_call.1} parent=1 // pred_check_branch
      %71 = sbr.rel (0) target = $region33
    $region32: #{tpu_custom_call.1} parent=1 // pred_region
      %72 = dma.done [#allocation9], 512
    $region33: #{tpu_custom_call.1} parent=1 // pred_fallthru
      _
    %v73 = vld [vmem:[#allocation2] sm:$0xff]
    %v74 = vld [vmem:[#allocation2 + $0x8] sm:$0xff]
    %v75 = vld [vmem:[#allocation7] sm:$0xff]
    %v76 = vld [vmem:[#allocation7 + $0x8] sm:$0xff]
    %v77 = vld [vmem:[#allocation7 + $0x10] sm:$0xff]
    %v78 = vld [vmem:[#allocation7 + $0x18] sm:$0xff]
    %vm79 = vcmask 261120
    %v81 = vsel %vm79, %v73, 0
    %v84 = vsel %vm79, %v74, 0
    %86 = vmatprep.subr.mxu0 0.0
    %87 = vmatpush1.msra.mxu0 0.0
    %88 = vmatprep.subr.mxu0 0.0
    %89 = vmatpush1.msra.mxu0 0.0
    %90 = vmatprep.subr.mxu0 0.0
    %91 = vmatpush1.msra.mxu0 0.0
    %92 = vmatprep.subr.mxu0 0.0
    %93 = vmatpush1.msra.mxu0 0.0
    %94 = vmatprep.subr.mxu0 0.0
    %95 = vmatpush1.msra.mxu0 0.0
    %96 = vmatprep.subr.mxu0 0.0
    %97 = vmatpush1.msra.mxu0 0.0
    %98 = vmatprep.subr.mxu0 0.0
    %99 = vmatpush1.msra.mxu0 0.0
    %100 = vmatprep.subr.mxu0 0.0
    %101 = vmatpush1.msra.mxu0 0.0
    %102 = vmatprep.subr.mxu0 0.0
    %103 = vmatpush1.msra.mxu0 0.0
    %104 = vmatprep.subr.mxu0 0.0
    %105 = vmatpush1.msra.mxu0 0.0
    %106 = vmatprep.subr.mxu0 0.0
    %107 = vmatpush1.msra.mxu0 0.0
    %108 = vmatprep.subr.mxu0 0.0
    %109 = vmatpush1.msra.mxu0 0.0
    %110 = vmatprep.subr.mxu0 0.0
    %111 = vmatpush1.msra.mxu0 %v78
    %112 = vmatprep.subr.mxu0 0.0
    %113 = vmatpush1.msra.mxu0 %v77
    %114 = vmatprep.subr.mxu0 0.0
    %115 = vmatpush1.msra.mxu0 %v76
    %116 = vmatprep.subr.mxu0 0.0
    %117 = vmatpush1.msra.mxu0 %v75
    %118 = vmatprep.subr.mxu0 0.0
    %119 = vmatpush2.msra.mxu0 0.0
    %120 = vmatprep.subr.mxu0 0.0
    %121 = vmatpush2.msra.mxu0 0.0
    %122 = vmatprep.subr.mxu0 0.0
    %123 = vmatpush2.msra.mxu0 0.0
    %124 = vmatprep.subr.mxu0 0.0
    %125 = vmatpush2.msra.mxu0 0.0
    %126 = vmatprep.subr.mxu0 0.0
    %127 = vmatpush2.msra.mxu0 0.0
    %128 = vmatprep.subr.mxu0 0.0
    %129 = vmatpush2.msra.mxu0 0.0
    %130 = vmatprep.subr.mxu0 0.0
    %131 = vmatpush2.msra.mxu0 0.0
    %132 = vmatprep.subr.mxu0 0.0
    %133 = vmatpush2.msra.mxu0 0.0
    %134 = vmatprep.subr.mxu0 0.0
    %135 = vmatpush2.msra.mxu0 0.0
    %136 = vmatprep.subr.mxu0 0.0
    %137 = vmatpush2.msra.mxu0 0.0
    %138 = vmatprep.subr.mxu0 0.0
    %139 = vmatpush2.msra.mxu0 0.0
    %140 = vmatprep.subr.mxu0 0.0
    %141 = vmatpush2.msra.mxu0 0.0
    %142 = vmatprep.subr.mxu0 0.0
    %143 = vmatpush2.msra.mxu0 0.0
    %144 = vmatprep.subr.mxu0 0.0
    %145 = vmatpush2.msra.mxu0 0.0
    %146 = vmatprep.subr.mxu0 0.0
    %147 = vmatpush2.msra.mxu0 0.0
    %148 = vmatprep.subr.mxu0 0.0
    %149 = vmatpush2.msra.mxu0 0.0
    %150 = vmatprep.mubr.f32.mxu0 0.0
    %151 = vmatmul.mubr.f32.gmra.mxu0 %v81
    %v152 = vpop.f32.mrf.mxu0
    %v153 = vadd.f32 0.0, %v152
    %v154 = vpop.f32.mrf.mxu0
    %155 = vmatprep.mubr.f32.mxu0 0.0
    %156 = vmatmul.mubr.f32.gmra.mxu0 %v84
    %v157 = vpop.f32.mrf.mxu0
    %v158 = vadd.f32 0.0, %v157
    %v159 = vpop.f32.mrf.mxu0
    %160 = vdwg.mxu0
    %v161 = vld [vmem:[#allocation5] sm:$0xff]
    %v162 = vld [vmem:[#allocation5 + $0x8] sm:$0xff]
    %v163 = vld [vmem:[#allocation8] sm:$0xff]
    %v164 = vld [vmem:[#allocation8 + $0x8] sm:$0xff]
    %v165 = vld [vmem:[#allocation8 + $0x10] sm:$0xff]
    %v166 = vld [vmem:[#allocation8 + $0x18] sm:$0xff]
    %v168 = vsel %vm79, %v161, 0
    %v171 = vsel %vm79, %v162, 0
    %173 = vmatprep.subr.mxu0 0.0
    %174 = vmatpush1.msra.mxu0 0.0
    %175 = vmatprep.subr.mxu0 0.0
    %176 = vmatpush1.msra.mxu0 0.0
    %177 = vmatprep.subr.mxu0 0.0
    %178 = vmatpush1.msra.mxu0 0.0
    %179 = vmatprep.subr.mxu0 0.0
    %180 = vmatpush1.msra.mxu0 0.0
    %181 = vmatprep.subr.mxu0 0.0
    %182 = vmatpush1.msra.mxu0 0.0
    %183 = vmatprep.subr.mxu0 0.0
    %184 = vmatpush1.msra.mxu0 0.0
    %185 = vmatprep.subr.mxu0 0.0
    %186 = vmatpush1.msra.mxu0 0.0
    %187 = vmatprep.subr.mxu0 0.0
    %188 = vmatpush1.msra.mxu0 0.0
    %189 = vmatprep.subr.mxu0 0.0
    %190 = vmatpush1.msra.mxu0 0.0
    %191 = vmatprep.subr.mxu0 0.0
    %192 = vmatpush1.msra.mxu0 0.0
    %193 = vmatprep.subr.mxu0 0.0
    %194 = vmatpush1.msra.mxu0 0.0
    %195 = vmatprep.subr.mxu0 0.0
    %196 = vmatpush1.msra.mxu0 0.0
    %197 = vmatprep.subr.mxu0 0.0
    %198 = vmatpush1.msra.mxu0 %v166
    %199 = vmatprep.subr.mxu0 0.0
    %200 = vmatpush1.msra.mxu0 %v165
    %201 = vmatprep.subr.mxu0 0.0
    %202 = vmatpush1.msra.mxu0 %v164
    %203 = vmatprep.subr.mxu0 0.0
    %204 = vmatpush1.msra.mxu0 %v163
    %205 = vmatprep.subr.mxu0 0.0
    %206 = vmatpush2.msra.mxu0 0.0
    %207 = vmatprep.subr.mxu0 0.0
    %208 = vmatpush2.msra.mxu0 0.0
    %209 = vmatprep.subr.mxu0 0.0
    %210 = vmatpush2.msra.mxu0 0.0
    %211 = vmatprep.subr.mxu0 0.0
    %212 = vmatpush2.msra.mxu0 0.0
    %213 = vmatprep.subr.mxu0 0.0
    %214 = vmatpush2.msra.mxu0 0.0
    %215 = vmatprep.subr.mxu0 0.0
    %216 = vmatpush2.msra.mxu0 0.0
    %217 = vmatprep.subr.mxu0 0.0
    %218 = vmatpush2.msra.mxu0 0.0
    %219 = vmatprep.subr.mxu0 0.0
    %220 = vmatpush2.msra.mxu0 0.0
    %221 = vmatprep.subr.mxu0 0.0
    %222 = vmatpush2.msra.mxu0 0.0
    %223 = vmatprep.subr.mxu0 0.0
    %224 = vmatpush2.msra.mxu0 0.0
    %225 = vmatprep.subr.mxu0 0.0
    %226 = vmatpush2.msra.mxu0 0.0
    %227 = vmatprep.subr.mxu0 0.0
    %228 = vmatpush2.msra.mxu0 0.0
    %229 = vmatprep.subr.mxu0 0.0
    %230 = vmatpush2.msra.mxu0 0.0
    %231 = vmatprep.subr.mxu0 0.0
    %232 = vmatpush2.msra.mxu0 0.0
    %233 = vmatprep.subr.mxu0 0.0
    %234 = vmatpush2.msra.mxu0 0.0
    %235 = vmatprep.subr.mxu0 0.0
    %236 = vmatpush2.msra.mxu0 0.0
    %237 = vmatprep.mubr.f32.mxu0 0.0
    %238 = vmatmul.mubr.f32.gmra.mxu0 %v168
    %v239 = vpop.f32.mrf.mxu0
    %v240 = vadd.f32 0.0, %v239
    %v241 = vpop.f32.mrf.mxu0
    %242 = vmatprep.mubr.f32.mxu0 0.0
    %243 = vmatmul.mubr.f32.gmra.mxu0 %v171
    %v244 = vpop.f32.mrf.mxu0
    %v245 = vadd.f32 0.0, %v244
    %v246 = vpop.f32.mrf.mxu0
    %247 = vdwg.mxu0
    %v248 = vsub.f32 %v240, %v153
    %v249 = vsub.f32 %v245, %v158
    %v250 = vmul.f32 %v248, %v248
    %v251 = vmul.f32 %v249, %v249
    %v252 = vadd.f32 %v250, %v251
    %253 = vadd.xlane.f32.xlu0 %v252
    %v254 = vpop.xlane.xlu0 %253
    %v255 = vrot.slane %v254, 4
    %v256 = vadd.f32 %v254, %v255
    %v257 = vrot.slane %v256, 2
    %v258 = vadd.f32 %v256, %v257
    %v259 = vrot.slane %v258, 1
    %v260 = vadd.f32 %v258, %v259
    %s261 = vtos %v260
    %s262 = scalar_lea.smem [#allocation10], 0
    %263 = sst [smem:[%s262]] %s261
    %v264 = vmul.f32 %v153, %v153
    %v265 = vmul.f32 %v158, %v158
    %v266 = vadd.f32 %v264, %v265
    %267 = vadd.xlane.f32.xlu0 %v266
    %v268 = vpop.xlane.xlu0 %267
    %v269 = vrot.slane %v268, 4
    %v270 = vadd.f32 %v268, %v269
    %v271 = vrot.slane %v270, 2
    %v272 = vadd.f32 %v270, %v271
    %v273 = vrot.slane %v272, 1
    %v274 = vadd.f32 %v272, %v273
    %s275 = vtos %v274
    %s276 = scalar_lea.smem [#allocation10], 1
    %277 = sst [smem:[%s276]] %s275
    // Predicated region
    $region34: #{tpu_custom_call.1} parent=1 // pred_check
      _
    $region35: #{tpu_custom_call.1} parent=1 // pred_check_branch
      %279 = sbr.rel (0) target = $region37
    $region36: #{tpu_custom_call.1} parent=1 // pred_region
      %s281 = ssub.s32 16, 16
      %282 = vsyncadd [#allocation4], %s281
      %285 = dma.smem_to_hbm [#allocation10], 16, %s4, [#allocation4]
    $region37: #{tpu_custom_call.1} parent=1 // pred_fallthru
      _
    // Predicated region
    $region38: #{tpu_custom_call.1} parent=1 // pred_check
      _
    $region39: #{tpu_custom_call.1} parent=1 // pred_check_branch
      %287 = sbr.rel (0) target = $region41
    $region40: #{tpu_custom_call.1} parent=1 // pred_region
      %288 = dma.done [#allocation4], 16
    $region41: #{tpu_custom_call.1} parent=1 // pred_fallthru
      _
    %289 = sfence
    %290 = vsyncpa [#allocation3], 1
    %291 = vsyncpa [#allocation6], 1
    %292 = vsyncpa [#allocation9], 1
    %293 = vsyncpa [#allocation4], 1

</llo_original>
